<compile_context>
chip_gen: v7x
topology: tpu7x:2x2x1
jax: 0.10.0
libtpu: 0.0.40
codegen_flags: <defaults>
</compile_context>

<pallas_src>
import jax
import jax.numpy as jnp
from jax import lax
from jax.experimental import pallas as pl
from jax.experimental.pallas import tpu as pltpu


def _round_up(x, m):
    return (x + m - 1) // m * m


def _positional_encoding(seq_len, d_model):
    """PE table (S, D) matching the PyTorch Position_Encoder (even & odd D)."""
    pos = jnp.arange(seq_len, dtype=jnp.float32)[:, None]          # (S, 1)
    col = jnp.arange(d_model)
    expo = (2 * (col // 2)).astype(jnp.float32) / d_model          # 2k & 2k+1 share
    angle = pos / (10000.0 ** expo)                                # (S, D)
    return jnp.where(col % 2 == 0, jnp.sin(angle), jnp.cos(angle)).astype(jnp.float32)


def _make_kernel(seq_tile, vocab_chunk, precision):
    def kernel(ids_ref, pe_ref, tbl_ref, out_ref):
        # ids_ref : VMEM (1, Ts, 1) int32   token ids of this (batch, seq-tile)
        # pe_ref  : VMEM (S_pad, D) f32     full PE table, resident (Buffered(1))
        # tbl_ref : VMEM (V, D)             full embedding table, resident
        # out_ref : VMEM (1, Ts, D)         output tile
        v, d = tbl_ref.shape
        ids = ids_ref[0]                                           # (Ts, 1)

        # Row gather as a vocab-chunked one-hot matmul on the MXU: the (Ts, Vc)
        # one-hot stays bounded regardless of V, and with precision=HIGHEST the
        # f32 gather is exact (1.0 * row + 0.0 * rest).
        # Note: out-of-range / negative ids yield all-zero rows (no match)
        # instead of raising like PyTorch.
        tok = jnp.zeros((seq_tile, d), jnp.float32)
        for c0 in range(0, v, vocab_chunk):
            vc = min(vocab_chunk, v - c0)
            col = c0 + lax.broadcasted_iota(jnp.int32, (seq_tile, vc), 1)
            onehot = (ids == col).astype(tbl_ref.dtype)            # (Ts, Vc)
            tok = tok + jnp.dot(onehot, tbl_ref[pl.ds(c0, vc), :],
                                preferred_element_type=jnp.float32,
                                precision=precision)               # (Ts, D)

        # Positional rows for this seq tile, sliced from the resident PE table.
        start = pl.multiple_of(pl.program_id(1) * seq_tile, seq_tile)
        pe = pe_ref[pl.ds(start, seq_tile), :]                     # (Ts, D)

        # TODO(synk): nn.Dropout is eval-mode identity; training mode would add
        # a pltpu.prng_seed / prng_random_bits keep-mask and 1/(1-p) scaling.
        out_ref[0] = (tok + pe).astype(out_ref.dtype)
    return kernel


def embedding_forward(ids, emb_table, *, seq_tile=256, vocab_chunk=512):
    """ids: (B, S) int32; emb_table: (V, D) -> (B, S, D) float32 (eval mode)."""
    B, S = ids.shape
    V, D = emb_table.shape
    tbl_dtype = emb_table.dtype          # keep native dtype (bf16 stays bf16)

    # Seq tile: multiple of 8 sublanes; small tiles for small S keep >= 2 grid
    # steps so both v7x TensorCores get work under the "parallel" axes.
    Ts = min(_round_up(S, 8), seq_tile)
    S_pad = _round_up(S, Ts)
    n_j = S_pad // Ts

    vc = min(vocab_chunk, V)

    # Gate: the one-hot MXU gather flips from HBM-bound to MXU-bound for large
    # vocabularies (V ~ few hundred on v5e, ~1-2K on v6e/v7x).
    # TODO(synk): large-V path (table left in HBM + manual row-DMA gather) is
    # not implemented; this kernel targets small/medium vocabularies.
    assert V <= 4096, "vocabulary too large for the one-hot resident-table path"

    # Hoisted PE table (position-only), computed once in plain JAX. It is no
    # longer tiled/written per token in HBM: it rides along resident in VMEM.
    pe = _positional_encoding(S, D)                                # (S, D) f32
    pe = jnp.pad(pe, ((0, S_pad - S), (0, 0)))

    ids_p = jnp.pad(ids.astype(jnp.int32), ((0, 0), (0, S_pad - S)))
    ids_p = ids_p[:, :, None]                                      # (B, S_pad, 1)

    # Exact f32 gather needs HIGHEST precision (default MXU precision would
    # truncate the f32 table to bf16); bf16 tables are exact at native rate.
    precision = lax.Precision.HIGHEST if tbl_dtype == jnp.float32 else None

    # ---- VMEM budget (per core) --------------------------------------------
    tbl_bytes = V * D * jnp.dtype(tbl_dtype).itemsize              # Buffered(1)
    pe_bytes = S_pad * D * 4                                       # Buffered(1)
    io_bytes = 2 * Ts * 4 + 2 * Ts * D * 4                         # dbl-buffered ids/out
    onehot_bytes = 3 * Ts * vc * 4                                 # one-hot + compare/iota
    slack = 2 << 20                                                # compiler scratch
    vmem_needed = tbl_bytes + pe_bytes + io_bytes + onehot_bytes + slack

    try:
        vmem_cap = int(pltpu.get_tpu_info().vmem_capacity_bytes)
    except Exception:
        vmem_cap = 64 << 20            # v7x per-TC physical VMEM (strictest)
    budget = min(vmem_cap // 2, 30 << 20)          # conservative per-core cap
    assert vmem_needed <= budget, (
        "embedding table / tiles too large for the resident-VMEM path")
    vmem_limit = min(vmem_cap - (4 << 20), max(vmem_needed + (8 << 20), 32 << 20))

    grid_spec = pltpu.PrefetchScalarGridSpec(
        num_scalar_prefetch=0,
        grid=(B, n_j),
        in_specs=[
            # ids tile: Ts*4 bytes per step — negligible vs the output stream.
            pl.BlockSpec((1, Ts, 1), lambda b, j: (b, j, 0)),
            # PE table resident: constant index_map -> fetched once from HBM;
            # Buffered(1) avoids a pointless second VMEM buffer.
            pl.BlockSpec((S_pad, D), lambda b, j: (0, 0),
                         pipeline_mode=pl.Buffered(1)),
            # Embedding table resident, single-buffered, native dtype.
            pl.BlockSpec((V, D), lambda b, j: (0, 0),
                         pipeline_mode=pl.Buffered(1)),
        ],
        out_specs=pl.BlockSpec((1, Ts, D), lambda b, j: (b, j, 0)),
    )

    # Output kept in f32 to match the PyTorch reference; downstream models that
    # accept bf16 can flip this dtype and halve the dominant HBM write stream.
    out = pl.pallas_call(
        _make_kernel(Ts, vc, precision),
        out_shape=jax.ShapeDtypeStruct((B, S_pad, D), jnp.float32),
        grid_spec=grid_spec,
        compiler_params=pltpu.CompilerParams(
            dimension_semantics=("parallel", "parallel"),
            vmem_limit_bytes=int(vmem_limit),
        ),
    )(ids_p, pe, emb_table)

    return out[:, :S, :]


def _reference(ids, emb_table):
    """Pure-JAX reference matching the PyTorch forward (eval mode)."""
    _, S = ids.shape
    _, D = emb_table.shape
    tok = emb_table[ids].astype(jnp.float32)                       # (B, S, D)
    return tok + _positional_encoding(S, D)[None, :, :]


if __name__ == "__main__":
    voc_num, d_model = 32, 32
    batch, seq_len = 2, 8
    p_drop = 0.1   # dropout is identity in eval mode

    key = jax.random.PRNGKey(0)
    k_w, k_x = jax.random.split(key)

    # nn.Embedding(voc_num, d_model, padding_idx=0): N(0,1) init, row 0 zeroed.
    emb_table = jax.random.normal(k_w, (voc_num, d_model), dtype=jnp.float32)
    emb_table = emb_table.at[0].set(0.0)

    ids = jax.random.randint(k_x, (batch, seq_len), 0, voc_num, dtype=jnp.int32)

    out = embedding_forward(ids, emb_table)
    jax.block_until_ready(out)

    ref = _reference(ids, emb_table)
    assert out.shape == (batch, seq_len, d_model)
    assert jnp.allclose(out, ref, atol=1e-5, rtol=1e-5), "mismatch vs reference"

    print("KERNEL_OK")
</pallas_src>

<mosaic_0001>
module attributes {stable_mosaic.version = 11 : i64} {
  func.func @kernel(%arg0: i32, %arg1: i32, %arg2: memref<1x8x1xi32, #tpu.memory_space<vmem>>, %arg3: memref<8x32xf32, #tpu.memory_space<vmem>>, %arg4: memref<32x32xf32, #tpu.memory_space<vmem>>, %arg5: memref<1x8x32xf32, #tpu.memory_space<vmem>>) attributes {dimension_semantics = [#tpu.dimension_semantics<parallel>, #tpu.dimension_semantics<parallel>], iteration_bounds = array<i64: 2, 1>, scalar_prefetch = 0 : i64, scratch_operands = 0 : i64, tpu.core_type = #tpu.core_type<tc>, window_params = [{transform_indices = @transform_0, window_bounds = array<i64: 1, 8, 1>}, {pipeline_mode = #tpu.pipeline_mode<synchronous>, transform_indices = @transform_1, window_bounds = array<i64: 8, 32>}, {pipeline_mode = #tpu.pipeline_mode<synchronous>, transform_indices = @transform_2, window_bounds = array<i64: 32, 32>}, {transform_indices = @transform_3, window_bounds = array<i64: 1, 8, 32>}]} {
    %c0 = arith.constant 0 : index
    %c0_0 = arith.constant 0 : index
    %c0_1 = arith.constant 0 : index
    %0 = vector.load %arg2[%c0, %c0_0, %c0_1] : memref<1x8x1xi32, #tpu.memory_space<vmem>>, vector<1x8x1xi32>
    %1 = vector.shape_cast %0 : vector<1x8x1xi32> to vector<8x1xi32>
    %cst = arith.constant 0.000000e+00 : f32
    %2 = vector.broadcast %cst : f32 to vector<8x32xf32>
    %3 = tpu.iota {dimensions = array<i32: 1>} : vector<8x32xi32>
    %c0_i32 = arith.constant 0 : i32
    %4 = vector.broadcast %c0_i32 : i32 to vector<8x32xi32>
    %5 = arith.addi %4, %3 : vector<8x32xi32>
    %6 = vector.broadcast %1 : vector<8x1xi32> to vector<8x32xi32>
    %7 = arith.cmpi eq, %6, %5 : vector<8x32xi32>
    %8 = arith.extui %7 : vector<8x32xi1> to vector<8x32xi32>
    %9 = arith.sitofp %8 : vector<8x32xi32> to vector<8x32xf32>
    %c0_2 = arith.constant 0 : index
    %c0_3 = arith.constant 0 : index
    %10 = vector.load %arg4[%c0_2, %c0_3] : memref<32x32xf32, #tpu.memory_space<vmem>>, vector<32x32xf32>
    %cst_4 = arith.constant dense<0.000000e+00> : vector<8x32xf32>
    %11 = tpu.matmul %9, %10, %cst_4 {dimension_numbers = #tpu.dot_dimension_numbers<[1], [0], [0], [1], [0, 0, 1, 1], [], []>, precision = #tpu.contract_precision<fp32>} : vector<8x32xf32>, vector<32x32xf32>, vector<8x32xf32> -> vector<8x32xf32>
    %12 = arith.addf %2, %11 : vector<8x32xf32>
    %c8_i32 = arith.constant 8 : i32
    %13 = arith.muli %arg1, %c8_i32 : i32
    %14 = tpu.assume_multiple %13, 8 : i32
    %15 = arith.index_cast %14 : i32 to index
    %c0_5 = arith.constant 0 : index
    %16 = vector.load %arg3[%15, %c0_5] : memref<8x32xf32, #tpu.memory_space<vmem>>, vector<8x32xf32>
    %17 = arith.addf %12, %16 : vector<8x32xf32>
    %c0_6 = arith.constant 0 : index
    %c0_7 = arith.constant 0 : index
    %c0_8 = arith.constant 0 : index
    %18 = vector.load %arg5[%c0_6, %c0_7, %c0_8] : memref<1x8x32xf32, #tpu.memory_space<vmem>>, vector<1x8x32xf32>
    %19 = vector.shape_cast %18 : vector<1x8x32xf32> to vector<8x32xf32>
    %20 = vector.shape_cast %17 : vector<8x32xf32> to vector<1x8x32xf32>
    tpu.vector_store %arg5[%c0_6, %c0_7, %c0_8], %20 {strides = array<i32>} : memref<1x8x32xf32, #tpu.memory_space<vmem>>, vector<1x8x32xf32>,
    return
  }
  func.func @transform_0(%arg0: i32, %arg1: i32) -> (i32, i32, i32) {
    %c0_i32 = arith.constant 0 : i32
    %c0_i32_0 = arith.constant 0 : i32
    return %arg0, %arg1, %c0_i32 : i32, i32, i32
  }
  func.func @transform_1(%arg0: i32, %arg1: i32) -> (i32, i32) {
    %c0_i32 = arith.constant 0 : i32
    %c0_i32_0 = arith.constant 0 : i32
    %c0_i32_1 = arith.constant 0 : i32
    return %c0_i32, %c0_i32_0 : i32, i32
  }
  func.func @transform_2(%arg0: i32, %arg1: i32) -> (i32, i32) {
    %c0_i32 = arith.constant 0 : i32
    %c0_i32_0 = arith.constant 0 : i32
    %c0_i32_1 = arith.constant 0 : i32
    return %c0_i32, %c0_i32_0 : i32, i32
  }
  func.func @transform_3(%arg0: i32, %arg1: i32) -> (i32, i32, i32) {
    %c0_i32 = arith.constant 0 : i32
    %c0_i32_0 = arith.constant 0 : i32
    return %arg0, %arg1, %c0_i32 : i32, i32, i32
  }
}

</mosaic_0001>

<llo_original>
// kernel: tpu_custom_call.1
$region0: #{tpu_custom_call.1}
  #allocation0 [shape = 'u32[]', space=smem, size = 0x4, offset = 0x4, fixed_abs, tag = 'smem constant byte address 0x4 - core index']
  #allocation1 [shape = 'u32[144,128]{1,0:T(1,128)}', space=vmem, size = 0x12000, scoped, tag = 'internal scratch']
  %s0 = inlined_call_operand.vmem [shape: s32[2,8,1], index: 0, kind: input, shape index: {}]
  %s1 = inlined_call_operand.vmem [shape: f32[8,32], index: 1, kind: input, shape index: {}]
  %s2 = inlined_call_operand.hbm [shape: f32[32,32], index: 2, kind: input, shape index: {}]
  %s3 = inlined_call_operand.hbm [shape: f32[2,8,32], index: 3, kind: output, shape index: {}]
  %s4 = sld [smem:[#allocation0]]
  $region49: #{tpu_custom_call.1} parent=0
    _
  %s6 = ssub.s32 1, %s4
  %s7 = scalar_select 0, %s6, %s4
  $region1: #{tpu_custom_call.1} parent=0
    #allocation2 [shape = 'u8[16384]{0}', space=vmem, size = 0x4000, scoped, tag = 'input window, operand 2, single buffered']
    #allocation3 [shape = 's32[2]{0}', space=sflag, size = 0x8, scoped, tag = 'scoped memory for tpu_custom_call.1']
    #allocation4 [shape = 's32[2]{0}', space=sflag, size = 0x8, scoped, tag = 'scoped memory for tpu_custom_call.1']
    #allocation5 [shape = 'u8[8192]{0}', space=vmem, size = 0x2000, scoped, tag = 'output window, operand 0']
    %8 = vsyncpa [#allocation3], 0
    %9 = vsyncpa [#allocation4], 0
    %s10 = scalar_lea.sflag [#allocation4], 1
    %11 = vsyncpa %s10, 0
    loop: start=0, step=1, limit=4
    $region2: #{tpu_custom_call.1} parent=1 // loop_pre_header
      _
    $region3: #{tpu_custom_call.1} parent=1 // loop_header
      %s13 = sphi 0, %s17
      %p14 = scmp.ge.s32.totalorder %s13, 4
      %s20 = sphi 0, %s32
      %s21 = sphi 0, %s28
      %s22 = sphi 0, %s20
      %s23 = sphi 0, %s21
      %s24 = sphi 0, %s22
      %s25 = sphi 0, %s23
      %s37 = sphi 0, %s39
      %s40 = sphi 0, %s37
      %s41 = sphi 0, %s40
      %s57 = sphi 0, %s41
      %s61 = sphi 0, %s61
      %s63 = sphi 0, %s61
      %s64 = sphi 0, %s63
      %s78 = sphi 0, %s64
      %s82 = sphi 0, %s82
      %s84 = sphi 0, %s82
      %s85 = sphi 0, %s84
      %s99 = sphi 0, %s85
      %s107 = sphi 0, %s109
      %s110 = sphi 0, %s107
      %s111 = sphi 0, %s110
      %s127 = sphi 0, %s111
    $region4: #{tpu_custom_call.1} parent=1 // loop_header_branch
      %16 = sbr.rel (%p14) target = $region8
    $region5: #{tpu_custom_call.1} parent=1 // loop_body
      %s18 = ssub.s32 %s13, 1
      %s19 = ssub.s32 %s13, 2
      %s26 = sadd.s32 1, %s21
      %p27 = scmp.ge.s32.totalorder %s26, 1
      %s28 = scalar_select %p27, 0, %s26
      %s29 = sadd.s32 1, %s20
      %s30 = scalar_select %p27, %s29, %s20
      %p31 = scmp.ge.s32.totalorder %s30, 2
      %s32 = scalar_select %p31, 0, %s30
      %s33 = ssub.s32 %s20, %s32
      %s34 = ssub.s32 %s21, %s28
      %s35 = sor.u32 %s33, %s34
      %p36 = scmp.eq.s32.totalorder %s35, 0
      %s38 = sadd.s32 %s37, 1
      %s39 = scalar_select %p36, %s37, %s38
      %p42 = pneg %p36
      %p43 = scmp.eq.s32.totalorder %s13, 1
      %p44 = por %p42, %p43
      %p45 = scmp.ne.s32.totalorder %s37, %s40
      %p46 = scmp.eq.s32.totalorder %s13, 0
      %p47 = por %p45, %p46
      %p48 = scmp.ne.s32.totalorder %s37, %s40
      %p49 = scmp.eq.s32.totalorder %s18, 1
      %p50 = por %p48, %p49
      %p51 = scmp.ne.s32.totalorder %s40, %s41
      %p52 = scmp.eq.s32.totalorder %s18, 0
      %p53 = por %p51, %p52
      %p54 = scmp.ne.s32.totalorder %s40, %s41
      %p55 = scmp.eq.s32.totalorder %s19, 1
      %p56 = por %p54, %p55
      %p58 = scmp.ne.s32.totalorder %s41, %s57
      %p59 = scmp.eq.s32.totalorder %s19, 0
      %p60 = por %p58, %p59
      %s62 = sadd.s32 %s61, 1
      %p65 = scmp.eq.s32.totalorder %s13, 1
      %p66 = scmp.ne.s32.totalorder %s61, %s63
      %p67 = scmp.eq.s32.totalorder %s13, 0
      %p68 = por %p66, %p67
      %p69 = scmp.ne.s32.totalorder %s61, %s63
      %p70 = scmp.eq.s32.totalorder %s18, 1
      %p71 = por %p69, %p70
      %p72 = scmp.ne.s32.totalorder %s63, %s64
      %p73 = scmp.eq.s32.totalorder %s18, 0
      %p74 = por %p72, %p73
      %p75 = scmp.ne.s32.totalorder %s63, %s64
      %p76 = scmp.eq.s32.totalorder %s19, 1
      %p77 = por %p75, %p76
      %p79 = scmp.ne.s32.totalorder %s64, %s78
      %p80 = scmp.eq.s32.totalorder %s19, 0
      %p81 = por %p79, %p80
      %s83 = sadd.s32 %s82, 1
      %p86 = scmp.eq.s32.totalorder %s13, 1
      %p87 = scmp.ne.s32.totalorder %s82, %s84
      %p88 = scmp.eq.s32.totalorder %s13, 0
      %p89 = por %p87, %p88
      %p90 = scmp.ne.s32.totalorder %s82, %s84
      %p91 = scmp.eq.s32.totalorder %s18, 1
      %p92 = por %p90, %p91
      %p93 = scmp.ne.s32.totalorder %s84, %s85
      %p94 = scmp.eq.s32.totalorder %s18, 0
      %p95 = por %p93, %p94
      %p96 = scmp.ne.s32.totalorder %s84, %s85
      %p97 = scmp.eq.s32.totalorder %s19, 1
      %p98 = por %p96, %p97
      %p100 = scmp.ne.s32.totalorder %s85, %s99
      %p101 = scmp.eq.s32.totalorder %s19, 0
      %p102 = por %p100, %p101
      %s103 = ssub.s32 %s20, %s32
      %s104 = ssub.s32 %s21, %s28
      %s105 = sor.u32 %s103, %s104
      %p106 = scmp.eq.s32.totalorder %s105, 0
      %s108 = sadd.s32 %s107, 1
      %s109 = scalar_select %p106, %s107, %s108
      %p112 = pneg %p106
      %p113 = scmp.eq.s32.totalorder %s13, 1
      %p114 = por %p112, %p113
      %p115 = scmp.ne.s32.totalorder %s107, %s110
      %p116 = scmp.eq.s32.totalorder %s13, 0
      %p117 = por %p115, %p116
      %p118 = scmp.ne.s32.totalorder %s107, %s110
      %p119 = scmp.eq.s32.totalorder %s18, 1
      %p120 = por %p118, %p119
      %p121 = scmp.ne.s32.totalorder %s110, %s111
      %p122 = scmp.eq.s32.totalorder %s18, 0
      %p123 = por %p121, %p122
      %p124 = scmp.ne.s32.totalorder %s110, %s111
      %p125 = scmp.eq.s32.totalorder %s19, 1
      %p126 = por %p124, %p125
      %p128 = scmp.ne.s32.totalorder %s111, %s127
      %p129 = scmp.eq.s32.totalorder %s19, 0
      %p130 = por %p128, %p129
      %p131 = scmp.le.s32.totalorder 1, %s13
      %p132 = scmp.lt.s32.totalorder %s13, 3
      %p133 = pnand %p131, %p132
      %p134 = pneg %p133
      // Predicated region
      $region9: #{tpu_custom_call.1} parent=5 // pred_check
        _
      $region10: #{tpu_custom_call.1} parent=5 // pred_check_branch
        %136 = sbr.rel (%p133) target = $region12
      $region11: #{tpu_custom_call.1} parent=5 // pred_region
        %s137 = ssub.s32 %s13, 1
        // Predicated region
        $region13: #{tpu_custom_call.1} parent=11 // pred_check
          %p138 = pneg %p74
        $region14: #{tpu_custom_call.1} parent=11 // pred_check_branch
          %140 = sbr.rel (%p138) target = $region16
        $region15: #{tpu_custom_call.1} parent=11 // pred_region
          _
        $region16: #{tpu_custom_call.1} parent=11 // pred_fallthru
          _
        // Predicated region
        $region17: #{tpu_custom_call.1} parent=11 // pred_check
          %p141 = pneg %p95
        $region18: #{tpu_custom_call.1} parent=11 // pred_check_branch
          %143 = sbr.rel (%p141) target = $region20
        $region19: #{tpu_custom_call.1} parent=11 // pred_region
          %s145 = ssub.s32 512, 512
          %146 = vsyncadd [#allocation3], %s145
          %s147 = sshll.u32 [#allocation2], 4
          %s148 = int_to_ptr.vmem [resolvable:$true] %s147
          %153 = dma.hbm_to_vmem [thread:$0]  %s2, 512, %s148, [#allocation3], 128, 128, 8
        $region20: #{tpu_custom_call.1} parent=11 // pred_fallthru
          _
      $region12: #{tpu_custom_call.1} parent=5 // pred_fallthru
        _
      %p154 = scmp.lt.s32.totalorder %s13, 2
      // Predicated region
      $region21: #{tpu_custom_call.1} parent=5 // pred_check
        %p155 = pneg %p154
      $region22: #{tpu_custom_call.1} parent=5 // pred_check_branch
        %157 = sbr.rel (%p155) target = $region24
      $region23: #{tpu_custom_call.1} parent=5 // pred_region
        // Predicated region
        $region25: #{tpu_custom_call.1} parent=23 // pred_check
          %p158 = pneg %p47
        $region26: #{tpu_custom_call.1} parent=23 // pred_check_branch
          %160 = sbr.rel (%p158) target = $region28
        $region27: #{tpu_custom_call.1} parent=23 // pred_region
          %p161 = scmp.lt.s32.totalorder %s20, 1
          %s162 = scalar_select %p161, %s20, 1
          %p163 = scmp.lt.s32.totalorder %s21, 0
          %s164 = scalar_select %p163, %s21, 0
          %s165 = sadd.s32 %s164, %s162
          %s166 = smul.addr %s165, 8
          %s167 = scalar_lea.vmem %s0, %s166
        $region28: #{tpu_custom_call.1} parent=23 // pred_fallthru
          _
      $region24: #{tpu_custom_call.1} parent=5 // pred_fallthru
        _
      %p168 = scmp.le.s32.totalorder 1, %s13
      %p169 = scmp.lt.s32.totalorder %s13, 3
      %p170 = pnand %p168, %p169
      %p171 = pneg %p170
      // Predicated region
      $region29: #{tpu_custom_call.1} parent=5 // pred_check
        _
      $region30: #{tpu_custom_call.1} parent=5 // pred_check_branch
        %173 = sbr.rel (%p170) target = $region32
      $region31: #{tpu_custom_call.1} parent=5 // pred_region
        %s174 = ssub.s32 %s13, 1
        // Predicated region
        $region33: #{tpu_custom_call.1} parent=31 // pred_check
          %p175 = pneg %p95
        $region34: #{tpu_custom_call.1} parent=31 // pred_check_branch
          %177 = sbr.rel (%p175) target = $region36
        $region35: #{tpu_custom_call.1} parent=31 // pred_region
          %178 = dma.done [#allocation3], 512
        $region36: #{tpu_custom_call.1} parent=31 // pred_fallthru
          _
        %p179 = scmp.lt.s32.totalorder %s22, 1
        %s180 = scalar_select %p179, %s22, 1
        %p181 = scmp.lt.s32.totalorder %s23, 0
        %s182 = scalar_select %p181, %s23, 0
        %s183 = sadd.s32 %s182, %s180
        %s184 = smul.addr %s183, 8
        %s185 = scalar_lea.vmem %s0, %s184
        %p186 = pneg %p53
        %p187 = pneg %p50
        %p188 = pneg %p74
        %p189 = pneg %p71
        %p190 = pneg %p95
        %p191 = pneg %p92
        %p192 = pneg %p123
        %p193 = pneg %p120
        %s194 = sand.u32 %s110, 1
        %s195 = scalar_lea.sflag [#allocation4], %s194
        %s196 = sand.u32 %s110, 1
        %s197 = smul.addr %s196, 8
        %s198 = scalar_lea.vmem [#allocation5], %s197
        %p199 = scmp.lt.s32.totalorder %s22, 1
        %s200 = scalar_select %p199, %s22, 1
        %p201 = scmp.lt.s32.totalorder %s23, 0
        %s202 = scalar_select %p201, %s23, 0
        %s203 = sadd.s32 %s202, %s200
        %s204 = smul.addr %s203, 8
        %s205 = scalar_lea.vmem %s0, %s204
        %v206 = vld [vmem:[%s205] sm:$0xff]
        %v207 = vlaneseq
        %v208 = vand.u32 %v207, 127
        %209 = vset.pattern.permute.xlu0 0
        %210 = vperm.xlu0 %209, %v206
        %v211 = vpop.permute.xlu0 %210
        %vm212 = vcmp.eq.s32.totalorder %v211, %v208
        %v213 = vsel %vm212, 1, 0
        %v214 = vcvt.s32.f32 %v213
        %v215 = vld [vmem:[#allocation2] sm:$0xff]
        %v216 = vld [vmem:[#allocation2 + $0x8] sm:$0xff]
        %v217 = vld [vmem:[#allocation2 + $0x10] sm:$0xff]
        %v218 = vld [vmem:[#allocation2 + $0x18] sm:$0xff]
        %s219 = smul.u32 %s23, 8
        %s220 = scalar_lea.vmem %s1, %s219
        %v221 = vld [vmem:[%s220] sm:$0xff]
        %vm222 = vcmask 261120
        %v224 = vsel %vm222, %v214, 0
        %226 = vmatprep.subr.mxu0 0.0
        %v227 = vand.u32 %v215, 4294901760
        %228 = vmatpush1.msra.mxu0 %v227
        %229 = vmatprep.subr.mxu0 0.0
        %v230 = vand.u32 %v216, 4294901760
        %231 = vmatpush1.msra.mxu0 %v230
        %232 = vmatprep.subr.mxu0 0.0
        %v233 = vand.u32 %v217, 4294901760
        %234 = vmatpush1.msra.mxu0 %v233
        %235 = vmatprep.subr.mxu0 0.0
        %v236 = vand.u32 %v218, 4294901760
        %237 = vmatpush1.msra.mxu0 %v236
        %238 = vmatprep.subr.mxu0 0.0
        %239 = vmatpush1.msra.mxu0 0.0
        %240 = vmatprep.subr.mxu0 0.0
        %241 = vmatpush1.msra.mxu0 0.0
        %242 = vmatprep.subr.mxu0 0.0
        %243 = vmatpush1.msra.mxu0 0.0
        %244 = vmatprep.subr.mxu0 0.0
        %245 = vmatpush1.msra.mxu0 0.0
        %246 = vmatprep.subr.mxu0 0.0
        %247 = vmatpush1.msra.mxu0 0.0
        %248 = vmatprep.subr.mxu0 0.0
        %249 = vmatpush1.msra.mxu0 0.0
        %250 = vmatprep.subr.mxu0 0.0
        %251 = vmatpush1.msra.mxu0 0.0
        %252 = vmatprep.subr.mxu0 0.0
        %253 = vmatpush1.msra.mxu0 0.0
        %254 = vmatprep.subr.mxu0 0.0
        %255 = vmatpush1.msra.mxu0 0.0
        %256 = vmatprep.subr.mxu0 0.0
        %257 = vmatpush1.msra.mxu0 0.0
        %258 = vmatprep.subr.mxu0 0.0
        %259 = vmatpush1.msra.mxu0 0.0
        %260 = vmatprep.subr.mxu0 0.0
        %261 = vmatpush1.msra.mxu0 0.0
        %262 = vmatprep.subr.mxu0 0.0
        %263 = vmatpush1.msra.mxu0 0.0
        %264 = vmatprep.subr.mxu0 0.0
        %265 = vmatpush1.msra.mxu0 0.0
        %266 = vmatprep.subr.mxu0 0.0
        %267 = vmatpush1.msra.mxu0 0.0
        %268 = vmatprep.subr.mxu0 0.0
        %269 = vmatpush1.msra.mxu0 0.0
        %270 = vmatprep.subr.mxu0 0.0
        %271 = vmatpush1.msra.mxu0 0.0
        %272 = vmatprep.subr.mxu0 0.0
        %273 = vmatpush1.msra.mxu0 0.0
        %274 = vmatprep.subr.mxu0 0.0
        %275 = vmatpush1.msra.mxu0 0.0
        %276 = vmatprep.subr.mxu0 0.0
        %277 = vmatpush1.msra.mxu0 0.0
        %278 = vmatprep.subr.mxu0 0.0
        %279 = vmatpush1.msra.mxu0 0.0
        %280 = vmatprep.subr.mxu0 0.0
        %281 = vmatpush1.msra.mxu0 0.0
        %282 = vmatprep.subr.mxu0 0.0
        %283 = vmatpush1.msra.mxu0 0.0
        %284 = vmatprep.subr.mxu0 0.0
        %285 = vmatpush1.msra.mxu0 0.0
        %286 = vmatprep.subr.mxu0 0.0
        %287 = vmatpush1.msra.mxu0 0.0
        %288 = vmatprep.subr.mxu0 0.0
        %289 = vmatpush1.msra.mxu0 0.0
        %290 = vmatprep.subr.mxu0 0.0
        %291 = vmatpush1.msra.mxu0 0.0
        %292 = vmatprep.subr.mxu0 0.0
        %293 = vmatpush1.msra.mxu0 0.0
        %294 = vmatprep.mubr.f32.mxu0 0.0
        %v295 = vand.u32 %v224, 4294901760
        %v296 = vsub.f32 %v224, %v295
        %v297 = vand.u32 %v296, 4294901760
        %v298 = vsub.f32 %v296, %v297
        %v299 = vand.u32 %v298, 4294901760
        %300 = vmatmul.mubr.f32.gmra.mrb[0].mxu0 %v299
        %v301 = vpop.f32.mrb[0].mxu0
        %v302 = vadd.f32 %v221, %v301
        %v303 = vpop.f32.mrb[0].mxu0
        %304 = vdwg.mxu0
        %305 = vmatprep.subr.mxu0 0.0
        %v306 = vand.u32 %v215, 4294901760
        %v307 = vsub.f32 %v215, %v306
        %v308 = vand.u32 %v307, 4294901760
        %v309 = vsub.f32 %v307, %v308
        %v310 = vand.u32 %v309, 4294901760
        %311 = vmatpush1.msra.mxu0 %v310
        %312 = vmatprep.subr.mxu0 0.0
        %v313 = vand.u32 %v216, 4294901760
        %v314 = vsub.f32 %v216, %v313
        %v315 = vand.u32 %v314, 4294901760
        %v316 = vsub.f32 %v314, %v315
        %v317 = vand.u32 %v316, 4294901760
        %318 = vmatpush1.msra.mxu0 %v317
        %319 = vmatprep.subr.mxu0 0.0
        %v320 = vand.u32 %v217, 4294901760
        %v321 = vsub.f32 %v217, %v320
        %v322 = vand.u32 %v321, 4294901760
        %v323 = vsub.f32 %v321, %v322
        %v324 = vand.u32 %v323, 4294901760
        %325 = vmatpush1.msra.mxu0 %v324
        %326 = vmatprep.subr.mxu0 0.0
        %v327 = vand.u32 %v218, 4294901760
        %v328 = vsub.f32 %v218, %v327
        %v329 = vand.u32 %v328, 4294901760
        %v330 = vsub.f32 %v328, %v329
        %v331 = vand.u32 %v330, 4294901760
        %332 = vmatpush1.msra.mxu0 %v331
        %333 = vmatprep.subr.mxu0 0.0
        %334 = vmatpush1.msra.mxu0 0.0
        %335 = vmatprep.subr.mxu0 0.0
        %336 = vmatpush1.msra.mxu0 0.0
        %337 = vmatprep.subr.mxu0 0.0
        %338 = vmatpush1.msra.mxu0 0.0
        %339 = vmatprep.subr.mxu0 0.0
        %340 = vmatpush1.msra.mxu0 0.0
        %341 = vmatprep.subr.mxu0 0.0
        %342 = vmatpush1.msra.mxu0 0.0
        %343 = vmatprep.subr.mxu0 0.0
        %344 = vmatpush1.msra.mxu0 0.0
        %345 = vmatprep.subr.mxu0 0.0
        %346 = vmatpush1.msra.mxu0 0.0
        %347 = vmatprep.subr.mxu0 0.0
        %348 = vmatpush1.msra.mxu0 0.0
        %349 = vmatprep.subr.mxu0 0.0
        %350 = vmatpush1.msra.mxu0 0.0
        %351 = vmatprep.subr.mxu0 0.0
        %352 = vmatpush1.msra.mxu0 0.0
        %353 = vmatprep.subr.mxu0 0.0
        %354 = vmatpush1.msra.mxu0 0.0
        %355 = vmatprep.subr.mxu0 0.0
        %356 = vmatpush1.msra.mxu0 0.0
        %357 = vmatprep.subr.mxu0 0.0
        %358 = vmatpush1.msra.mxu0 0.0
        %359 = vmatprep.subr.mxu0 0.0
        %360 = vmatpush1.msra.mxu0 0.0
        %361 = vmatprep.subr.mxu0 0.0
        %362 = vmatpush1.msra.mxu0 0.0
        %363 = vmatprep.subr.mxu0 0.0
        %364 = vmatpush1.msra.mxu0 0.0
        %365 = vmatprep.subr.mxu0 0.0
        %366 = vmatpush1.msra.mxu0 0.0
        %367 = vmatprep.subr.mxu0 0.0
        %368 = vmatpush1.msra.mxu0 0.0
        %369 = vmatprep.subr.mxu0 0.0
        %370 = vmatpush1.msra.mxu0 0.0
        %371 = vmatprep.subr.mxu0 0.0
        %372 = vmatpush1.msra.mxu0 0.0
        %373 = vmatprep.subr.mxu0 0.0
        %374 = vmatpush1.msra.mxu0 0.0
        %375 = vmatprep.subr.mxu0 0.0
        %376 = vmatpush1.msra.mxu0 0.0
        %377 = vmatprep.subr.mxu0 0.0
        %378 = vmatpush1.msra.mxu0 0.0
        %379 = vmatprep.subr.mxu0 0.0
        %380 = vmatpush1.msra.mxu0 0.0
        %381 = vmatprep.subr.mxu0 0.0
        %382 = vmatpush1.msra.mxu0 0.0
        %383 = vmatprep.subr.mxu0 0.0
        %384 = vmatpush1.msra.mxu0 0.0
        %385 = vmatprep.subr.mxu0 0.0
        %386 = vmatpush1.msra.mxu0 0.0
        %387 = vmatprep.subr.mxu0 0.0
        %388 = vmatpush1.msra.mxu0 0.0
        %389 = vmatprep.mubr.f32.mxu0 0.0
        %v390 = vand.u32 %v224, 4294901760
        %391 = vmatmul.mubr.f32.gmra.mrb[0].mxu0 %v390
        %v392 = vpop.f32.mrb[0].mxu0
        %v393 = vadd.f32 %v302, %v392
        %v394 = vpop.f32.mrb[0].mxu0
        %395 = vdwg.mxu0
        %396 = vmatprep.subr.mxu0 0.0
        %v397 = vand.u32 %v215, 4294901760
        %v398 = vsub.f32 %v215, %v397
        %399 = vmatpush1.msra.mxu0 %v398
        %400 = vmatprep.subr.mxu0 0.0
        %v401 = vand.u32 %v216, 4294901760
        %v402 = vsub.f32 %v216, %v401
        %403 = vmatpush1.msra.mxu0 %v402
        %404 = vmatprep.subr.mxu0 0.0
        %v405 = vand.u32 %v217, 4294901760
        %v406 = vsub.f32 %v217, %v405
        %407 = vmatpush1.msra.mxu0 %v406
        %408 = vmatprep.subr.mxu0 0.0
        %v409 = vand.u32 %v218, 4294901760
        %v410 = vsub.f32 %v218, %v409
        %411 = vmatpush1.msra.mxu0 %v410
        %412 = vmatprep.subr.mxu0 0.0
        %413 = vmatpush1.msra.mxu0 0.0
        %414 = vmatprep.subr.mxu0 0.0
        %415 = vmatpush1.msra.mxu0 0.0
        %416 = vmatprep.subr.mxu0 0.0
        %417 = vmatpush1.msra.mxu0 0.0
        %418 = vmatprep.subr.mxu0 0.0
        %419 = vmatpush1.msra.mxu0 0.0
        %420 = vmatprep.subr.mxu0 0.0
        %421 = vmatpush1.msra.mxu0 0.0
        %422 = vmatprep.subr.mxu0 0.0
        %423 = vmatpush1.msra.mxu0 0.0
        %424 = vmatprep.subr.mxu0 0.0
        %425 = vmatpush1.msra.mxu0 0.0
        %426 = vmatprep.subr.mxu0 0.0
        %427 = vmatpush1.msra.mxu0 0.0
        %428 = vmatprep.subr.mxu0 0.0
        %429 = vmatpush1.msra.mxu0 0.0
        %430 = vmatprep.subr.mxu0 0.0
        %431 = vmatpush1.msra.mxu0 0.0
        %432 = vmatprep.subr.mxu0 0.0
        %433 = vmatpush1.msra.mxu0 0.0
        %434 = vmatprep.subr.mxu0 0.0
        %435 = vmatpush1.msra.mxu0 0.0
        %436 = vmatprep.subr.mxu0 0.0
        %437 = vmatpush1.msra.mxu0 0.0
        %438 = vmatprep.subr.mxu0 0.0
        %439 = vmatpush1.msra.mxu0 0.0
        %440 = vmatprep.subr.mxu0 0.0
        %441 = vmatpush1.msra.mxu0 0.0
        %442 = vmatprep.subr.mxu0 0.0
        %443 = vmatpush1.msra.mxu0 0.0
        %444 = vmatprep.subr.mxu0 0.0
        %445 = vmatpush1.msra.mxu0 0.0
        %446 = vmatprep.subr.mxu0 0.0
        %447 = vmatpush1.msra.mxu0 0.0
        %448 = vmatprep.subr.mxu0 0.0
        %449 = vmatpush1.msra.mxu0 0.0
        %450 = vmatprep.subr.mxu0 0.0
        %451 = vmatpush1.msra.mxu0 0.0
        %452 = vmatprep.subr.mxu0 0.0
        %453 = vmatpush1.msra.mxu0 0.0
        %454 = vmatprep.subr.mxu0 0.0
        %455 = vmatpush1.msra.mxu0 0.0
        %456 = vmatprep.subr.mxu0 0.0
        %457 = vmatpush1.msra.mxu0 0.0
        %458 = vmatprep.subr.mxu0 0.0
        %459 = vmatpush1.msra.mxu0 0.0
        %460 = vmatprep.subr.mxu0 0.0
        %461 = vmatpush1.msra.mxu0 0.0
        %462 = vmatprep.subr.mxu0 0.0
        %463 = vmatpush1.msra.mxu0 0.0
        %464 = vmatprep.subr.mxu0 0.0
        %465 = vmatpush1.msra.mxu0 0.0
        %466 = vmatprep.subr.mxu0 0.0
        %467 = vmatpush1.msra.mxu0 0.0
        %468 = vmatprep.mubr.f32.mxu0 0.0
        %v469 = vand.u32 %v224, 4294901760
        %v470 = vsub.f32 %v224, %v469
        %471 = vmatmul.mubr.f32.gmra.mrb[0].mxu0 %v470
        %v472 = vpop.f32.mrb[0].mxu0
        %v473 = vadd.f32 %v393, %v472
        %v474 = vpop.f32.mrb[0].mxu0
        %475 = vdwg.mxu0
        %476 = vmatprep.subr.mxu0 0.0
        %v477 = vand.u32 %v215, 4294901760
        %478 = vmatpush1.msra.mxu0 %v477
        %479 = vmatprep.subr.mxu0 0.0
        %v480 = vand.u32 %v216, 4294901760
        %481 = vmatpush1.msra.mxu0 %v480
        %482 = vmatprep.subr.mxu0 0.0
        %v483 = vand.u32 %v217, 4294901760
        %484 = vmatpush1.msra.mxu0 %v483
        %485 = vmatprep.subr.mxu0 0.0
        %v486 = vand.u32 %v218, 4294901760
        %487 = vmatpush1.msra.mxu0 %v486
        %488 = vmatprep.subr.mxu0 0.0
        %489 = vmatpush1.msra.mxu0 0.0
        %490 = vmatprep.subr.mxu0 0.0
        %491 = vmatpush1.msra.mxu0 0.0
        %492 = vmatprep.subr.mxu0 0.0
        %493 = vmatpush1.msra.mxu0 0.0
        %494 = vmatprep.subr.mxu0 0.0
        %495 = vmatpush1.msra.mxu0 0.0
        %496 = vmatprep.subr.mxu0 0.0
        %497 = vmatpush1.msra.mxu0 0.0
        %498 = vmatprep.subr.mxu0 0.0
        %499 = vmatpush1.msra.mxu0 0.0
        %500 = vmatprep.subr.mxu0 0.0
        %501 = vmatpush1.msra.mxu0 0.0
        %502 = vmatprep.subr.mxu0 0.0
        %503 = vmatpush1.msra.mxu0 0.0
        %504 = vmatprep.subr.mxu0 0.0
        %505 = vmatpush1.msra.mxu0 0.0
        %506 = vmatprep.subr.mxu0 0.0
        %507 = vmatpush1.msra.mxu0 0.0
        %508 = vmatprep.subr.mxu0 0.0
        %509 = vmatpush1.msra.mxu0 0.0
        %510 = vmatprep.subr.mxu0 0.0
        %511 = vmatpush1.msra.mxu0 0.0
        %512 = vmatprep.subr.mxu0 0.0
        %513 = vmatpush1.msra.mxu0 0.0
        %514 = vmatprep.subr.mxu0 0.0
        %515 = vmatpush1.msra.mxu0 0.0
        %516 = vmatprep.subr.mxu0 0.0
        %517 = vmatpush1.msra.mxu0 0.0
        %518 = vmatprep.subr.mxu0 0.0
        %519 = vmatpush1.msra.mxu0 0.0
        %520 = vmatprep.subr.mxu0 0.0
        %521 = vmatpush1.msra.mxu0 0.0
        %522 = vmatprep.subr.mxu0 0.0
        %523 = vmatpush1.msra.mxu0 0.0
        %524 = vmatprep.subr.mxu0 0.0
        %525 = vmatpush1.msra.mxu0 0.0
        %526 = vmatprep.subr.mxu0 0.0
        %527 = vmatpush1.msra.mxu0 0.0
        %528 = vmatprep.subr.mxu0 0.0
        %529 = vmatpush1.msra.mxu0 0.0
        %530 = vmatprep.subr.mxu0 0.0
        %531 = vmatpush1.msra.mxu0 0.0
        %532 = vmatprep.subr.mxu0 0.0
        %533 = vmatpush1.msra.mxu0 0.0
        %534 = vmatprep.subr.mxu0 0.0
        %535 = vmatpush1.msra.mxu0 0.0
        %536 = vmatprep.subr.mxu0 0.0
        %537 = vmatpush1.msra.mxu0 0.0
        %538 = vmatprep.subr.mxu0 0.0
        %539 = vmatpush1.msra.mxu0 0.0
        %540 = vmatprep.subr.mxu0 0.0
        %541 = vmatpush1.msra.mxu0 0.0
        %542 = vmatprep.subr.mxu0 0.0
        %543 = vmatpush1.msra.mxu0 0.0
        %544 = vmatprep.mubr.f32.mxu0 0.0
        %v545 = vand.u32 %v224, 4294901760
        %v546 = vsub.f32 %v224, %v545
        %v547 = vand.u32 %v546, 4294901760
        %548 = vmatmul.mubr.f32.gmra.mrb[0].mxu0 %v547
        %v549 = vpop.f32.mrb[0].mxu0
        %v550 = vadd.f32 %v473, %v549
        %v551 = vpop.f32.mrb[0].mxu0
        %552 = vdwg.mxu0
        %553 = vmatprep.subr.mxu0 0.0
        %v554 = vand.u32 %v215, 4294901760
        %v555 = vsub.f32 %v215, %v554
        %v556 = vand.u32 %v555, 4294901760
        %557 = vmatpush1.msra.mxu0 %v556
        %558 = vmatprep.subr.mxu0 0.0
        %v559 = vand.u32 %v216, 4294901760
        %v560 = vsub.f32 %v216, %v559
        %v561 = vand.u32 %v560, 4294901760
        %562 = vmatpush1.msra.mxu0 %v561
        %563 = vmatprep.subr.mxu0 0.0
        %v564 = vand.u32 %v217, 4294901760
        %v565 = vsub.f32 %v217, %v564
        %v566 = vand.u32 %v565, 4294901760
        %567 = vmatpush1.msra.mxu0 %v566
        %568 = vmatprep.subr.mxu0 0.0
        %v569 = vand.u32 %v218, 4294901760
        %v570 = vsub.f32 %v218, %v569
        %v571 = vand.u32 %v570, 4294901760
        %572 = vmatpush1.msra.mxu0 %v571
        %573 = vmatprep.subr.mxu0 0.0
        %574 = vmatpush1.msra.mxu0 0.0
        %575 = vmatprep.subr.mxu0 0.0
        %576 = vmatpush1.msra.mxu0 0.0
        %577 = vmatprep.subr.mxu0 0.0
        %578 = vmatpush1.msra.mxu0 0.0
        %579 = vmatprep.subr.mxu0 0.0
        %580 = vmatpush1.msra.mxu0 0.0
        %581 = vmatprep.subr.mxu0 0.0
        %582 = vmatpush1.msra.mxu0 0.0
        %583 = vmatprep.subr.mxu0 0.0
        %584 = vmatpush1.msra.mxu0 0.0
        %585 = vmatprep.subr.mxu0 0.0
        %586 = vmatpush1.msra.mxu0 0.0
        %587 = vmatprep.subr.mxu0 0.0
        %588 = vmatpush1.msra.mxu0 0.0
        %589 = vmatprep.subr.mxu0 0.0
        %590 = vmatpush1.msra.mxu0 0.0
        %591 = vmatprep.subr.mxu0 0.0
        %592 = vmatpush1.msra.mxu0 0.0
        %593 = vmatprep.subr.mxu0 0.0
        %594 = vmatpush1.msra.mxu0 0.0
        %595 = vmatprep.subr.mxu0 0.0
        %596 = vmatpush1.msra.mxu0 0.0
        %597 = vmatprep.subr.mxu0 0.0
        %598 = vmatpush1.msra.mxu0 0.0
        %599 = vmatprep.subr.mxu0 0.0
        %600 = vmatpush1.msra.mxu0 0.0
        %601 = vmatprep.subr.mxu0 0.0
        %602 = vmatpush1.msra.mxu0 0.0
        %603 = vmatprep.subr.mxu0 0.0
        %604 = vmatpush1.msra.mxu0 0.0
        %605 = vmatprep.subr.mxu0 0.0
        %606 = vmatpush1.msra.mxu0 0.0
        %607 = vmatprep.subr.mxu0 0.0
        %608 = vmatpush1.msra.mxu0 0.0
        %609 = vmatprep.subr.mxu0 0.0
        %610 = vmatpush1.msra.mxu0 0.0
        %611 = vmatprep.subr.mxu0 0.0
        %612 = vmatpush1.msra.mxu0 0.0
        %613 = vmatprep.subr.mxu0 0.0
        %614 = vmatpush1.msra.mxu0 0.0
        %615 = vmatprep.subr.mxu0 0.0
        %616 = vmatpush1.msra.mxu0 0.0
        %617 = vmatprep.subr.mxu0 0.0
        %618 = vmatpush1.msra.mxu0 0.0
        %619 = vmatprep.subr.mxu0 0.0
        %620 = vmatpush1.msra.mxu0 0.0
        %621 = vmatprep.subr.mxu0 0.0
        %622 = vmatpush1.msra.mxu0 0.0
        %623 = vmatprep.subr.mxu0 0.0
        %624 = vmatpush1.msra.mxu0 0.0
        %625 = vmatprep.subr.mxu0 0.0
        %626 = vmatpush1.msra.mxu0 0.0
        %627 = vmatprep.subr.mxu0 0.0
        %628 = vmatpush1.msra.mxu0 0.0
        %629 = vmatprep.mubr.f32.mxu0 0.0
        %v630 = vand.u32 %v224, 4294901760
        %631 = vmatmul.mubr.f32.gmra.mrb[0].mxu0 %v630
        %v632 = vpop.f32.mrb[0].mxu0
        %v633 = vadd.f32 %v550, %v632
        %v634 = vpop.f32.mrb[0].mxu0
        %635 = vdwg.mxu0
        %636 = vmatprep.subr.mxu0 0.0
        %v637 = vand.u32 %v215, 4294901760
        %638 = vmatpush1.msra.mxu0 %v637
        %639 = vmatprep.subr.mxu0 0.0
        %v640 = vand.u32 %v216, 4294901760
        %641 = vmatpush1.msra.mxu0 %v640
        %642 = vmatprep.subr.mxu0 0.0
        %v643 = vand.u32 %v217, 4294901760
        %644 = vmatpush1.msra.mxu0 %v643
        %645 = vmatprep.subr.mxu0 0.0
        %v646 = vand.u32 %v218, 4294901760
        %647 = vmatpush1.msra.mxu0 %v646
        %648 = vmatprep.subr.mxu0 0.0
        %649 = vmatpush1.msra.mxu0 0.0
        %650 = vmatprep.subr.mxu0 0.0
        %651 = vmatpush1.msra.mxu0 0.0
        %652 = vmatprep.subr.mxu0 0.0
        %653 = vmatpush1.msra.mxu0 0.0
        %654 = vmatprep.subr.mxu0 0.0
        %655 = vmatpush1.msra.mxu0 0.0
        %656 = vmatprep.subr.mxu0 0.0
        %657 = vmatpush1.msra.mxu0 0.0
        %658 = vmatprep.subr.mxu0 0.0
        %659 = vmatpush1.msra.mxu0 0.0
        %660 = vmatprep.subr.mxu0 0.0
        %661 = vmatpush1.msra.mxu0 0.0
        %662 = vmatprep.subr.mxu0 0.0
        %663 = vmatpush1.msra.mxu0 0.0
        %664 = vmatprep.subr.mxu0 0.0
        %665 = vmatpush1.msra.mxu0 0.0
        %666 = vmatprep.subr.mxu0 0.0
        %667 = vmatpush1.msra.mxu0 0.0
        %668 = vmatprep.subr.mxu0 0.0
        %669 = vmatpush1.msra.mxu0 0.0
        %670 = vmatprep.subr.mxu0 0.0
        %671 = vmatpush1.msra.mxu0 0.0
        %672 = vmatprep.subr.mxu0 0.0
        %673 = vmatpush1.msra.mxu0 0.0
        %674 = vmatprep.subr.mxu0 0.0
        %675 = vmatpush1.msra.mxu0 0.0
        %676 = vmatprep.subr.mxu0 0.0
        %677 = vmatpush1.msra.mxu0 0.0
        %678 = vmatprep.subr.mxu0 0.0
        %679 = vmatpush1.msra.mxu0 0.0
        %680 = vmatprep.subr.mxu0 0.0
        %681 = vmatpush1.msra.mxu0 0.0
        %682 = vmatprep.subr.mxu0 0.0
        %683 = vmatpush1.msra.mxu0 0.0
        %684 = vmatprep.subr.mxu0 0.0
        %685 = vmatpush1.msra.mxu0 0.0
        %686 = vmatprep.subr.mxu0 0.0
        %687 = vmatpush1.msra.mxu0 0.0
        %688 = vmatprep.subr.mxu0 0.0
        %689 = vmatpush1.msra.mxu0 0.0
        %690 = vmatprep.subr.mxu0 0.0
        %691 = vmatpush1.msra.mxu0 0.0
        %692 = vmatprep.subr.mxu0 0.0
        %693 = vmatpush1.msra.mxu0 0.0
        %694 = vmatprep.subr.mxu0 0.0
        %695 = vmatpush1.msra.mxu0 0.0
        %696 = vmatprep.subr.mxu0 0.0
        %697 = vmatpush1.msra.mxu0 0.0
        %698 = vmatprep.subr.mxu0 0.0
        %699 = vmatpush1.msra.mxu0 0.0
        %700 = vmatprep.subr.mxu0 0.0
        %701 = vmatpush1.msra.mxu0 0.0
        %702 = vmatprep.subr.mxu0 0.0
        %703 = vmatpush1.msra.mxu0 0.0
        %704 = vmatprep.mubr.f32.mxu0 0.0
        %v705 = vand.u32 %v224, 4294901760
        %706 = vmatmul.mubr.f32.gmra.mrb[0].mxu0 %v705
        %v707 = vpop.f32.mrb[0].mxu0
        %v708 = vadd.f32 %v633, %v707
        %v709 = vpop.f32.mrb[0].mxu0
        %710 = vdwg.mxu0
        %711 = vst.msk [vmem:[%s198] sm:$0xff] %vm222, %v708
        %s712 = sand.u32 %s110, 1
        %s713 = scalar_lea.sflag [#allocation4], %s712
        %s714 = sand.u32 %s110, 1
        %s715 = smul.addr %s714, 8
        %s716 = scalar_lea.vmem [#allocation5], %s715
        // Predicated region
        $region37: #{tpu_custom_call.1} parent=31 // pred_check
          %p717 = pneg %p120
        $region38: #{tpu_custom_call.1} parent=31 // pred_check_branch
          %719 = sbr.rel (%p717) target = $region40
        $region39: #{tpu_custom_call.1} parent=31 // pred_region
          %s721 = ssub.s32 128, 128
          %722 = vsyncadd %s713, %s721
          %s723 = sadd.s32 %s23, %s22
          %s724 = smul.addr %s723, 128
          %s725 = scalar_lea.hbm %s3, %s724
          %s727 = sshll.u32 %s716, 4
          %s728 = int_to_ptr.vmem [resolvable:$true] %s727
          %730 = dma.vmem_to_hbm [thread:$0]  %s728, 128, %s725, %s713
        $region40: #{tpu_custom_call.1} parent=31 // pred_fallthru
          _
      $region32: #{tpu_custom_call.1} parent=5 // pred_fallthru
        _
      %p731 = scmp.le.s32.totalorder 2, %s13
      // Predicated region
      $region41: #{tpu_custom_call.1} parent=5 // pred_check
        %p732 = pneg %p731
      $region42: #{tpu_custom_call.1} parent=5 // pred_check_branch
        %734 = sbr.rel (%p732) target = $region44
      $region43: #{tpu_custom_call.1} parent=5 // pred_region
        %s735 = ssub.s32 %s13, 2
        // Predicated region
        $region45: #{tpu_custom_call.1} parent=43 // pred_check
          %p736 = pneg %p126
        $region46: #{tpu_custom_call.1} parent=43 // pred_check_branch
          %738 = sbr.rel (%p736) target = $region48
        $region47: #{tpu_custom_call.1} parent=43 // pred_region
          %s739 = sand.u32 %s111, 1
          %s740 = scalar_lea.sflag [#allocation4], %s739
          %s741 = sand.u32 %s111, 1
          %s742 = smul.addr %s741, 8
          %s743 = scalar_lea.vmem [#allocation5], %s742
          %744 = dma.done %s740, 128
        $region48: #{tpu_custom_call.1} parent=43 // pred_fallthru
          _
      $region44: #{tpu_custom_call.1} parent=5 // pred_fallthru
        _
    $region6: #{tpu_custom_call.1} parent=1 // loop_footer
      %s17 = sadd.s32 1, %s13
    $region7: #{tpu_custom_call.1} parent=1 // loop_footer_branch
      %12 = sbr.rel target = $region3
    $region8: #{tpu_custom_call.1} parent=1 // loop_exit
      _
    %745 = vsyncpa [#allocation3], 1
    %s746 = scalar_lea.sflag [#allocation3], 1
    %747 = vsyncpa %s746, 1
    %748 = vsyncpa [#allocation4], 1
    %s749 = scalar_lea.sflag [#allocation4], 1
    %750 = vsyncpa %s749, 1

</llo_original>
